<compile_context>
chip_gen: v7x
topology: tpu7x:2x2x1
jax: 0.10.0
libtpu: 0.0.40
codegen_flags: <defaults>
</compile_context>

<pallas_src>
import functools

import jax
import jax.numpy as jnp
from jax.experimental import pallas as pl
from jax.experimental.pallas import tpu as pltpu


_LANE = 128
_SUBLANE = 8
_MAX_TILE_B = 512  # batch tile cap (review: 512-1024 reaches ~85%+ of roofline)


def _round_up(x, m):
    return ((x + m - 1) // m) * m


def _pad2d(x, rows, cols):
    r, c = x.shape
    return jnp.pad(x, ((0, rows - r), (0, cols - c)))


@functools.lru_cache(maxsize=1)
def _num_tensorcores():
    """TensorCores per chip (2 on v7x, 1 on v5e/v6e). Only used to decide
    whether to force >=2 'parallel' grid steps; falls back to 1 if the query
    is unavailable."""
    try:
        info = pltpu.get_tpu_info()
        for attr in ("num_cores", "core_count", "tensorcore_count",
                     "num_tensorcores"):
            n = getattr(info, attr, None)
            if isinstance(n, int) and n > 0:
                return min(n, 2)
    except Exception:
        pass
    try:
        n = getattr(jax.devices()[0], "num_cores", None)
        if isinstance(n, int) and n > 0:
            return min(n, 2)
    except Exception:
        pass
    return 1


def _tiling(batch, num_cores=1):
    """Pick (padded_batch, tile_b).

    - rows are padded only to the sublane (8) / tile granularity (never a
      fixed 256 multiple); padding is kept < 25% of the batch,
    - tile_b is capped at _MAX_TILE_B,
    - on 2-TC chips (v7x) force >=2 grid steps when there are enough rows so
      the 'parallel' axis shards across both TensorCores.
    """
    bp = _round_up(batch, _SUBLANE)
    min_tiles = 2 if (num_cores >= 2 and bp >= 2 * _SUBLANE) else 1
    tile_b = min(_MAX_TILE_B, _round_up(-(-bp // min_tiles), _SUBLANE))
    # Shrink the tile while rounding bp to a tile multiple would waste >25%.
    while tile_b > _SUBLANE and 4 * (_round_up(bp, tile_b) - bp) > bp:
        tile_b = _round_up(tile_b // 2, _SUBLANE)
    bp = _round_up(bp, tile_b)
    return bp, tile_b


# ----------------------------- params --------------------------------------


def init_ode_func_params(key, latent_dim, n_units, dtype=jnp.float32):
    """Matches utils.init_network_weights: W ~ N(0, 0.1), b = 0."""
    k1, k2, k3 = jax.random.split(key, 3)
    return {
        "w1": (jax.random.normal(k1, (latent_dim, n_units)) * 0.1).astype(dtype),
        "b1": jnp.zeros((1, n_units), dtype),
        "w2": (jax.random.normal(k2, (n_units, n_units)) * 0.1).astype(dtype),
        "b2": jnp.zeros((1, n_units), dtype),
        "w3": (jax.random.normal(k3, (n_units, latent_dim)) * 0.1).astype(dtype),
        "b3": jnp.zeros((1, latent_dim), dtype),
    }


def pack_ode_func_params(params, compute_dtype=jnp.float32):
    """Pad the hidden dim (n_units) to a lane multiple ONCE, outside the hot
    path.  `compute_dtype=jnp.bfloat16` is the v6e/v7x knob (halves weight DMA
    and doubles MXU rate; accumulation stays f32); default f32 keeps the 1e-5
    reference tolerance and is required on v5e (no bf16 VPU/EUP)."""
    latent, n_units = params["w1"].shape
    hp = _round_up(n_units, _LANE)
    f32 = jnp.float32
    return {
        "w1": _pad2d(params["w1"].astype(f32), latent, hp).astype(compute_dtype),
        "b1": _pad2d(params["b1"].astype(f32).reshape(1, -1), 1, hp),
        "w2": _pad2d(params["w2"].astype(f32), hp, hp).astype(compute_dtype),
        "b2": _pad2d(params["b2"].astype(f32).reshape(1, -1), 1, hp),
        "w3": _pad2d(params["w3"].astype(f32), hp, latent).astype(compute_dtype),
        "b3": params["b3"].astype(f32).reshape(1, -1),
    }


# ----------------------------- kernels --------------------------------------


def _mlp(y, w1, b1, w2, b2, w3, b3):
    """(Linear -> tanh) x2 -> Linear.  Weights may be f32 or bf16; MXU always
    accumulates in f32.  Zero-padded hidden columns stay inert (tanh(0)=0)."""
    h = jnp.tanh(jnp.dot(y.astype(w1.dtype), w1,
                         preferred_element_type=jnp.float32) + b1)
    h = jnp.tanh(jnp.dot(h.astype(w2.dtype), w2,
                         preferred_element_type=jnp.float32) + b2)
    return jnp.dot(h.astype(w3.dtype), w3,
                   preferred_element_type=jnp.float32) + b3


def _grad_kernel(y_ref, w1_ref, b1_ref, w2_ref, b2_ref, w3_ref, b3_ref,
                 out_ref, *, backwards):
    """One ODE-RHS evaluation.  `backwards` is a static kernel variant; the
    negation is folded at trace time (no runtime multiply)."""
    y = y_ref[...].astype(jnp.float32)
    g = _mlp(y, w1_ref[...], b1_ref[...], w2_ref[...], b2_ref[...],
             w3_ref[...], b3_ref[...])
    if backwards:
        g = -g
    out_ref[...] = g.astype(out_ref.dtype)


def _euler_kernel(y_ref, w1_ref, b1_ref, w2_ref, b2_ref, w3_ref, b3_ref,
                  out_ref, *, n_steps, unroll):
    """Fused explicit-Euler integration: n_steps RHS evals in one launch.
    w3/b3 arrive pre-scaled by the signed step size, so the loop body is just
    y + mlp(y)."""
    # Weights loaded once per tile, hoisted above the time-step loop.
    w1 = w1_ref[...]
    w2 = w2_ref[...]
    w3 = w3_ref[...]
    tile_b = y_ref.shape[0]
    # Hoist bias broadcasts out of the loop (JAX doesn't CSE broadcast_in_dim).
    b1 = jnp.broadcast_to(b1_ref[...], (tile_b, w1.shape[1]))
    b2 = jnp.broadcast_to(b2_ref[...], (tile_b, w2.shape[1]))
    b3 = jnp.broadcast_to(b3_ref[...], (tile_b, w3.shape[1]))

    y0 = y_ref[...].astype(jnp.float32)

    def body(_, y):
        return y + _mlp(y, w1, b1, w2, b2, w3, b3)

    y = jax.lax.fori_loop(0, n_steps, body, y0, unroll=unroll)
    out_ref[...] = y.astype(out_ref.dtype)


# ----------------------------- wrappers -------------------------------------


def _cost(rows, latent, hp, n_steps):
    flops = 2 * rows * (latent * hp + hp * hp + hp * latent) * n_steps
    transc = 2 * rows * hp * n_steps
    nbytes = 4 * (2 * rows * latent + latent * hp + hp * hp + hp * latent
                  + 2 * hp + latent)
    return pl.CostEstimate(flops=int(flops), transcendentals=int(transc),
                           bytes_accessed=int(nbytes))


def _specs_and_pad(y, latent, hp):
    batch = y.shape[0]
    bp, tile_b = _tiling(batch, _num_tensorcores())
    # Rows are padded only when needed (batch not a tile multiple); padded
    # rows never contaminate real rows (row-independent MLP) and are sliced
    # off by the caller.  NOTE: never reduce over the batch axis in-kernel.
    y_in = y if bp == batch else jnp.pad(y, ((0, bp - batch), (0, 0)))
    row_spec = pl.BlockSpec((tile_b, latent), lambda i: (i, 0))

    def const(shape):
        # Constant index_map -> weights stay resident in VMEM across the grid.
        return pl.BlockSpec(shape, lambda i: (0, 0))

    in_specs = [row_spec,
                const((latent, hp)), const((1, hp)),
                const((hp, hp)), const((1, hp)),
                const((hp, latent)), const((1, latent))]
    return y_in, bp, tile_b, row_spec, in_specs


@functools.partial(jax.jit, static_argnames=("backwards",))
def ode_func_forward(t_local, y, packed_params, backwards=False):
    """ODEFunc.forward(t_local, y, backwards): dy/dt = gradient_net(y),
    negated if backwards.  t_local is accepted for API parity but (as in the
    PyTorch module) unused.  `packed_params` from pack_ode_func_params."""
    del t_local  # unused by get_ode_gradient_nn
    batch, latent = y.shape
    hp = packed_params["w1"].shape[1]
    y_in, bp, tile_b, row_spec, in_specs = _specs_and_pad(y, latent, hp)

    kernel = functools.partial(_grad_kernel, backwards=backwards)
    out = pl.pallas_call(
        kernel,
        out_shape=jax.ShapeDtypeStruct((bp, latent), y.dtype),
        grid=(bp // tile_b,),
        in_specs=in_specs,
        out_specs=row_spec,
        compiler_params=pltpu.CompilerParams(
            dimension_semantics=("parallel",)),
        cost_estimate=_cost(bp, latent, hp, 1),
    )(y_in, packed_params["w1"], packed_params["b1"], packed_params["w2"],
      packed_params["b2"], packed_params["w3"], packed_params["b3"])
    return out if bp == batch else out[:batch]


@functools.partial(jax.jit, static_argnames=("n_steps", "backwards"))
def ode_euler_integrate(y0, t0, t1, packed_params, n_steps, backwards=False):
    """Integrate dy/dt = ODEFunc.forward(t, y, backwards) from t0 to t1 with
    n_steps explicit-Euler steps inside a single pallas_call (launch cost and
    weight HBM->VMEM DMA paid once)."""
    batch, latent = y0.shape
    hp = packed_params["w1"].shape[1]
    y_in, bp, tile_b, row_spec, in_specs = _specs_and_pad(y0, latent, hp)

    # Fold the signed Euler step into the last layer once in the wrapper
    # (tiny (hp, latent)/(1, latent) arrays) -> no per-step VPU scale and no
    # scalar-prefetch dt inside the kernel.
    dt = (jnp.asarray(t1, jnp.float32) - jnp.asarray(t0, jnp.float32)) / n_steps
    step = -dt if backwards else dt
    w3 = (packed_params["w3"].astype(jnp.float32) * step).astype(
        packed_params["w3"].dtype)
    b3 = packed_params["b3"] * step

    unroll = True if n_steps <= 32 else 4
    kernel = functools.partial(_euler_kernel, n_steps=n_steps, unroll=unroll)
    out = pl.pallas_call(
        kernel,
        out_shape=jax.ShapeDtypeStruct((bp, latent), y0.dtype),
        grid=(bp // tile_b,),
        in_specs=in_specs,
        out_specs=row_spec,
        compiler_params=pltpu.CompilerParams(
            dimension_semantics=("parallel",)),
        cost_estimate=_cost(bp, latent, hp, n_steps),
    )(y_in, packed_params["w1"], packed_params["b1"], packed_params["w2"],
      packed_params["b2"], w3, b3)
    return out if bp == batch else out[:batch]


# ----------------------------- references -----------------------------------


def _reference_grad(y, params, backwards=False):
    h1 = jnp.tanh(y @ params["w1"] + params["b1"])
    h2 = jnp.tanh(h1 @ params["w2"] + params["b2"])
    g = h2 @ params["w3"] + params["b3"]
    return -g if backwards else g


def _reference_euler(y0, t0, t1, params, n_steps, backwards=False):
    dt = (t1 - t0) / n_steps
    step = -dt if backwards else dt
    y = y0
    for _ in range(n_steps):
        y = y + step * _reference_grad(y, params)
    return y


if __name__ == "__main__":
    key = jax.random.PRNGKey(0)
    k_params, k_y, k_y2 = jax.random.split(key, 3)

    batch = 8
    latent_dim = 32
    n_units = 64

    params = init_ode_func_params(k_params, latent_dim, n_units)
    packed = pack_ode_func_params(params)  # pad hidden dim once, off hot path
    y = jax.random.normal(k_y, (batch, latent_dim), dtype=jnp.float32)
    t_local = jnp.float32(0.5)

    # Single RHS evaluation (the module's forward), forward & backwards.
    grad = jax.block_until_ready(ode_func_forward(t_local, y, packed))
    grad_bwd = jax.block_until_ready(
        ode_func_forward(t_local, y, packed, backwards=True))
    assert jnp.allclose(grad, _reference_grad(y, params),
                        atol=1e-5, rtol=1e-5)
    assert jnp.allclose(grad_bwd, _reference_grad(y, params, backwards=True),
                        atol=1e-5, rtol=1e-5)

    # Non-sublane-multiple batch exercises the row pad/slice path.
    y_odd = jax.random.normal(k_y2, (13, latent_dim), dtype=jnp.float32)
    grad_odd = jax.block_until_ready(ode_func_forward(t_local, y_odd, packed))
    assert grad_odd.shape == y_odd.shape
    assert jnp.allclose(grad_odd, _reference_grad(y_odd, params),
                        atol=1e-5, rtol=1e-5)

    # Fused Euler integration (many forward() calls amortized in one launch).
    n_steps = 16
    y_T = jax.block_until_ready(
        ode_euler_integrate(y, 0.0, 1.0, packed, n_steps=n_steps))
    ref_T = _reference_euler(y, 0.0, 1.0, params, n_steps)
    assert jnp.allclose(y_T, ref_T, atol=1e-4, rtol=1e-4)

    y_T_bwd = jax.block_until_ready(
        ode_euler_integrate(y, 0.0, 1.0, packed, n_steps=n_steps,
                            backwards=True))
    ref_T_bwd = _reference_euler(y, 0.0, 1.0, params, n_steps, backwards=True)
    assert jnp.allclose(y_T_bwd, ref_T_bwd, atol=1e-4, rtol=1e-4)

    print("KERNEL_OK")
</pallas_src>

<mosaic_0001>
module attributes {stable_mosaic.version = 11 : i64} {
  func.func @_grad_kernel(%arg0: i32, %arg1: memref<8x32xf32, #tpu.memory_space<vmem>>, %arg2: memref<32x128xf32, #tpu.memory_space<vmem>>, %arg3: memref<1x128xf32, #tpu.memory_space<vmem>>, %arg4: memref<128x128xf32, #tpu.memory_space<vmem>>, %arg5: memref<1x128xf32, #tpu.memory_space<vmem>>, %arg6: memref<128x32xf32, #tpu.memory_space<vmem>>, %arg7: memref<1x32xf32, #tpu.memory_space<vmem>>, %arg8: memref<8x32xf32, #tpu.memory_space<vmem>>) attributes {dimension_semantics = [#tpu.dimension_semantics<parallel>], iteration_bounds = array<i64: 1>, scalar_prefetch = 0 : i64, scratch_operands = 0 : i64, tpu.core_type = #tpu.core_type<tc>, window_params = [{transform_indices = @transform_0, window_bounds = array<i64: 8, 32>}, {pipeline_mode = #tpu.pipeline_mode<synchronous>, transform_indices = @transform_1, window_bounds = array<i64: 32, 128>}, {pipeline_mode = #tpu.pipeline_mode<synchronous>, transform_indices = @transform_2, window_bounds = array<i64: 1, 128>}, {pipeline_mode = #tpu.pipeline_mode<synchronous>, transform_indices = @transform_3, window_bounds = array<i64: 128, 128>}, {pipeline_mode = #tpu.pipeline_mode<synchronous>, transform_indices = @transform_4, window_bounds = array<i64: 1, 128>}, {pipeline_mode = #tpu.pipeline_mode<synchronous>, transform_indices = @transform_5, window_bounds = array<i64: 128, 32>}, {pipeline_mode = #tpu.pipeline_mode<synchronous>, transform_indices = @transform_6, window_bounds = array<i64: 1, 32>}, {transform_indices = @transform_7, window_bounds = array<i64: 8, 32>}]} {
    %c0 = arith.constant 0 : index
    %c0_0 = arith.constant 0 : index
    %0 = vector.load %arg1[%c0, %c0_0] : memref<8x32xf32, #tpu.memory_space<vmem>>, vector<8x32xf32>
    %c0_1 = arith.constant 0 : index
    %c0_2 = arith.constant 0 : index
    %1 = vector.load %arg2[%c0_1, %c0_2] : memref<32x128xf32, #tpu.memory_space<vmem>>, vector<32x128xf32>
    %c0_3 = arith.constant 0 : index
    %c0_4 = arith.constant 0 : index
    %2 = vector.load %arg3[%c0_3, %c0_4] : memref<1x128xf32, #tpu.memory_space<vmem>>, vector<1x128xf32>
    %c0_5 = arith.constant 0 : index
    %c0_6 = arith.constant 0 : index
    %3 = vector.load %arg4[%c0_5, %c0_6] : memref<128x128xf32, #tpu.memory_space<vmem>>, vector<128x128xf32>
    %c0_7 = arith.constant 0 : index
    %c0_8 = arith.constant 0 : index
    %4 = vector.load %arg5[%c0_7, %c0_8] : memref<1x128xf32, #tpu.memory_space<vmem>>, vector<1x128xf32>
    %c0_9 = arith.constant 0 : index
    %c0_10 = arith.constant 0 : index
    %5 = vector.load %arg6[%c0_9, %c0_10] : memref<128x32xf32, #tpu.memory_space<vmem>>, vector<128x32xf32>
    %c0_11 = arith.constant 0 : index
    %c0_12 = arith.constant 0 : index
    %6 = vector.load %arg7[%c0_11, %c0_12] : memref<1x32xf32, #tpu.memory_space<vmem>>, vector<1x32xf32>
    %cst = arith.constant dense<0.000000e+00> : vector<8x128xf32>
    %7 = tpu.matmul %0, %1, %cst {dimension_numbers = #tpu.dot_dimension_numbers<[1], [0], [0], [1], [0, 0, 1, 1], [], []>} : vector<8x32xf32>, vector<32x128xf32>, vector<8x128xf32> -> vector<8x128xf32>
    %8 = vector.broadcast %2 : vector<1x128xf32> to vector<8x128xf32>
    %9 = arith.addf %7, %8 : vector<8x128xf32>
    %10 = math.tanh %9 : vector<8x128xf32>
    %cst_13 = arith.constant dense<0.000000e+00> : vector<8x128xf32>
    %11 = tpu.matmul %10, %3, %cst_13 {dimension_numbers = #tpu.dot_dimension_numbers<[1], [0], [0], [1], [0, 0, 1, 1], [], []>} : vector<8x128xf32>, vector<128x128xf32>, vector<8x128xf32> -> vector<8x128xf32>
    %12 = vector.broadcast %4 : vector<1x128xf32> to vector<8x128xf32>
    %13 = arith.addf %11, %12 : vector<8x128xf32>
    %14 = math.tanh %13 : vector<8x128xf32>
    %cst_14 = arith.constant dense<0.000000e+00> : vector<8x32xf32>
    %15 = tpu.matmul %14, %5, %cst_14 {dimension_numbers = #tpu.dot_dimension_numbers<[1], [0], [0], [1], [0, 0, 1, 1], [], []>} : vector<8x128xf32>, vector<128x32xf32>, vector<8x32xf32> -> vector<8x32xf32>
    %16 = vector.broadcast %6 : vector<1x32xf32> to vector<8x32xf32>
    %17 = arith.addf %15, %16 : vector<8x32xf32>
    %c0_15 = arith.constant 0 : index
    %c0_16 = arith.constant 0 : index
    %18 = vector.load %arg8[%c0_15, %c0_16] : memref<8x32xf32, #tpu.memory_space<vmem>>, vector<8x32xf32>
    tpu.vector_store %arg8[%c0_15, %c0_16], %17 {strides = array<i32>} : memref<8x32xf32, #tpu.memory_space<vmem>>, vector<8x32xf32>,
    return
  }
  func.func @transform_0(%arg0: i32) -> (i32, i32) {
    %c0_i32 = arith.constant 0 : i32
    %c0_i32_0 = arith.constant 0 : i32
    return %arg0, %c0_i32 : i32, i32
  }
  func.func @transform_1(%arg0: i32) -> (i32, i32) {
    %c0_i32 = arith.constant 0 : i32
    %c0_i32_0 = arith.constant 0 : i32
    %c0_i32_1 = arith.constant 0 : i32
    return %c0_i32, %c0_i32_0 : i32, i32
  }
  func.func @transform_2(%arg0: i32) -> (i32, i32) {
    %c0_i32 = arith.constant 0 : i32
    %c0_i32_0 = arith.constant 0 : i32
    %c0_i32_1 = arith.constant 0 : i32
    return %c0_i32, %c0_i32_0 : i32, i32
  }
  func.func @transform_3(%arg0: i32) -> (i32, i32) {
    %c0_i32 = arith.constant 0 : i32
    %c0_i32_0 = arith.constant 0 : i32
    %c0_i32_1 = arith.constant 0 : i32
    return %c0_i32, %c0_i32_0 : i32, i32
  }
  func.func @transform_4(%arg0: i32) -> (i32, i32) {
    %c0_i32 = arith.constant 0 : i32
    %c0_i32_0 = arith.constant 0 : i32
    %c0_i32_1 = arith.constant 0 : i32
    return %c0_i32, %c0_i32_0 : i32, i32
  }
  func.func @transform_5(%arg0: i32) -> (i32, i32) {
    %c0_i32 = arith.constant 0 : i32
    %c0_i32_0 = arith.constant 0 : i32
    %c0_i32_1 = arith.constant 0 : i32
    return %c0_i32, %c0_i32_0 : i32, i32
  }
  func.func @transform_6(%arg0: i32) -> (i32, i32) {
    %c0_i32 = arith.constant 0 : i32
    %c0_i32_0 = arith.constant 0 : i32
    %c0_i32_1 = arith.constant 0 : i32
    return %c0_i32, %c0_i32_0 : i32, i32
  }
  func.func @transform_7(%arg0: i32) -> (i32, i32) {
    %c0_i32 = arith.constant 0 : i32
    %c0_i32_0 = arith.constant 0 : i32
    return %arg0, %c0_i32 : i32, i32
  }
}

</mosaic_0001>

<llo_original>
// kernel: ode_func_forward.1
$region0: #{ode_func_forward.1}
  #allocation0 [shape = 'u32[]', space=smem, size = 0x4, offset = 0x4, fixed_abs, tag = 'smem constant byte address 0x4 - core index']
  #allocation1 [shape = 'u32[144,128]{1,0:T(1,128)}', space=vmem, size = 0x12000, scoped, tag = 'internal scratch']
  %s0 = inlined_call_operand.vmem [shape: f32[8,32], index: 0, kind: input, shape index: {}]
  %s1 = inlined_call_operand.vmem [shape: f32[32,128], index: 1, kind: input, shape index: {}]
  %s2 = inlined_call_operand.vmem [shape: f32[1,128], index: 2, kind: input, shape index: {}]
  %s3 = inlined_call_operand.vmem [shape: f32[128,128], index: 3, kind: input, shape index: {}]
  %s4 = inlined_call_operand.vmem [shape: f32[1,128], index: 4, kind: input, shape index: {}]
  %s5 = inlined_call_operand.vmem [shape: f32[128,32], index: 5, kind: input, shape index: {}]
  %s6 = inlined_call_operand.vmem [shape: f32[1,32], index: 6, kind: input, shape index: {}]
  %s7 = inlined_call_operand.hbm [shape: f32[8,32], index: 7, kind: output, shape index: {}]
  %s8 = sld [smem:[#allocation0]]
  $region38: #{ode_func_forward.1} parent=0
    _
  %s10 = ssub.s32 1, %s8
  %s11 = scalar_select 0, %s10, %s8
  $region1: #{ode_func_forward.1} parent=0
    #allocation2 [shape = 'u8[4096]{0}', space=vmem, size = 0x1000, scoped, tag = 'output window, operand 0, single buffered']
    #allocation3 [shape = 's32[1]{0}', space=sflag, size = 0x4, scoped, tag = 'scoped memory for ode_func_forward.1']
    %12 = vsyncpa [#allocation3], 0
    // Predicated region
    $region2: #{ode_func_forward.1} parent=1 // pred_check
      _
    $region3: #{ode_func_forward.1} parent=1 // pred_check_branch
      %14 = sbr.rel (0) target = $region5
    $region4: #{ode_func_forward.1} parent=1 // pred_region
      _
    $region5: #{ode_func_forward.1} parent=1 // pred_fallthru
      _
    // Predicated region
    $region6: #{ode_func_forward.1} parent=1 // pred_check
      _
    $region7: #{ode_func_forward.1} parent=1 // pred_check_branch
      %16 = sbr.rel (0) target = $region9
    $region8: #{ode_func_forward.1} parent=1 // pred_region
      _
    $region9: #{ode_func_forward.1} parent=1 // pred_fallthru
      _
    // Predicated region
    $region10: #{ode_func_forward.1} parent=1 // pred_check
      _
    $region11: #{ode_func_forward.1} parent=1 // pred_check_branch
      %18 = sbr.rel (0) target = $region13
    $region12: #{ode_func_forward.1} parent=1 // pred_region
      _
    $region13: #{ode_func_forward.1} parent=1 // pred_fallthru
      _
    // Predicated region
    $region14: #{ode_func_forward.1} parent=1 // pred_check
      _
    $region15: #{ode_func_forward.1} parent=1 // pred_check_branch
      %20 = sbr.rel (0) target = $region17
    $region16: #{ode_func_forward.1} parent=1 // pred_region
      _
    $region17: #{ode_func_forward.1} parent=1 // pred_fallthru
      _
    // Predicated region
    $region18: #{ode_func_forward.1} parent=1 // pred_check
      _
    $region19: #{ode_func_forward.1} parent=1 // pred_check_branch
      %22 = sbr.rel (0) target = $region21
    $region20: #{ode_func_forward.1} parent=1 // pred_region
      _
    $region21: #{ode_func_forward.1} parent=1 // pred_fallthru
      _
    // Predicated region
    $region22: #{ode_func_forward.1} parent=1 // pred_check
      _
    $region23: #{ode_func_forward.1} parent=1 // pred_check_branch
      %24 = sbr.rel (0) target = $region25
    $region24: #{ode_func_forward.1} parent=1 // pred_region
      _
    $region25: #{ode_func_forward.1} parent=1 // pred_fallthru
      _
    // Predicated region
    $region26: #{ode_func_forward.1} parent=1 // pred_check
      _
    $region27: #{ode_func_forward.1} parent=1 // pred_check_branch
      %26 = sbr.rel (0) target = $region29
    $region28: #{ode_func_forward.1} parent=1 // pred_region
      _
    $region29: #{ode_func_forward.1} parent=1 // pred_fallthru
      _
    %v27 = vld [vmem:[%s0] sm:$0xff]
    %v28 = vld [vmem:[%s1] sm:$0xff]
    %v29 = vld [vmem:[%s1 + $0x8] sm:$0xff]
    %v30 = vld [vmem:[%s1 + $0x10] sm:$0xff]
    %v31 = vld [vmem:[%s1 + $0x18] sm:$0xff]
    %v32 = vld [vmem:[%s2] sm:$0x1]
    %v33 = vld [vmem:[%s3] sm:$0xff]
    %v34 = vld [vmem:[%s3 + $0x8] sm:$0xff]
    %v35 = vld [vmem:[%s3 + $0x10] sm:$0xff]
    %v36 = vld [vmem:[%s3 + $0x18] sm:$0xff]
    %v37 = vld [vmem:[%s3 + $0x20] sm:$0xff]
    %v38 = vld [vmem:[%s3 + $0x28] sm:$0xff]
    %v39 = vld [vmem:[%s3 + $0x30] sm:$0xff]
    %v40 = vld [vmem:[%s3 + $0x38] sm:$0xff]
    %v41 = vld [vmem:[%s3 + $0x40] sm:$0xff]
    %v42 = vld [vmem:[%s3 + $0x48] sm:$0xff]
    %v43 = vld [vmem:[%s3 + $0x50] sm:$0xff]
    %v44 = vld [vmem:[%s3 + $0x58] sm:$0xff]
    %v45 = vld [vmem:[%s3 + $0x60] sm:$0xff]
    %v46 = vld [vmem:[%s3 + $0x68] sm:$0xff]
    %v47 = vld [vmem:[%s3 + $0x70] sm:$0xff]
    %v48 = vld [vmem:[%s3 + $0x78] sm:$0xff]
    %v49 = vld [vmem:[%s4] sm:$0x1]
    %v50 = vld [vmem:[%s5] sm:$0xff]
    %v51 = vld [vmem:[%s5 + $0x8] sm:$0xff]
    %v52 = vld [vmem:[%s5 + $0x10] sm:$0xff]
    %v53 = vld [vmem:[%s5 + $0x18] sm:$0xff]
    %v54 = vld [vmem:[%s5 + $0x20] sm:$0xff]
    %v55 = vld [vmem:[%s5 + $0x28] sm:$0xff]
    %v56 = vld [vmem:[%s5 + $0x30] sm:$0xff]
    %v57 = vld [vmem:[%s5 + $0x38] sm:$0xff]
    %v58 = vld [vmem:[%s5 + $0x40] sm:$0xff]
    %v59 = vld [vmem:[%s5 + $0x48] sm:$0xff]
    %v60 = vld [vmem:[%s5 + $0x50] sm:$0xff]
    %v61 = vld [vmem:[%s5 + $0x58] sm:$0xff]
    %v62 = vld [vmem:[%s5 + $0x60] sm:$0xff]
    %v63 = vld [vmem:[%s5 + $0x68] sm:$0xff]
    %v64 = vld [vmem:[%s5 + $0x70] sm:$0xff]
    %v65 = vld [vmem:[%s5 + $0x78] sm:$0xff]
    %v66 = vld [vmem:[%s6] sm:$0x1]
    %v68 = vlaneseq
    %v69 = vshrl.u32 %v68, 7
    %v70 = vsub.s32 0, %v69
    %v71 = vrot.slane %v32, %v70
    %vm73 = vcmask 261120
    %v75 = vsel %vm73, %v27, 0
    %77 = vmatprep.subr.mxu0 0.0
    %78 = vmatpush1.msra.mxu0 %v28
    %79 = vmatprep.subr.mxu0 0.0
    %80 = vmatpush1.msra.mxu0 %v29
    %81 = vmatprep.subr.mxu0 0.0
    %82 = vmatpush1.msra.mxu0 %v30
    %83 = vmatprep.subr.mxu0 0.0
    %84 = vmatpush1.msra.mxu0 %v31
    %85 = vmatprep.subr.mxu0 0.0
    %86 = vmatpush1.msra.mxu0 0.0
    %87 = vmatprep.subr.mxu0 0.0
    %88 = vmatpush1.msra.mxu0 0.0
    %89 = vmatprep.subr.mxu0 0.0
    %90 = vmatpush1.msra.mxu0 0.0
    %91 = vmatprep.subr.mxu0 0.0
    %92 = vmatpush1.msra.mxu0 0.0
    %93 = vmatprep.subr.mxu0 0.0
    %94 = vmatpush1.msra.mxu0 0.0
    %95 = vmatprep.subr.mxu0 0.0
    %96 = vmatpush1.msra.mxu0 0.0
    %97 = vmatprep.subr.mxu0 0.0
    %98 = vmatpush1.msra.mxu0 0.0
    %99 = vmatprep.subr.mxu0 0.0
    %100 = vmatpush1.msra.mxu0 0.0
    %101 = vmatprep.subr.mxu0 0.0
    %102 = vmatpush1.msra.mxu0 0.0
    %103 = vmatprep.subr.mxu0 0.0
    %104 = vmatpush1.msra.mxu0 0.0
    %105 = vmatprep.subr.mxu0 0.0
    %106 = vmatpush1.msra.mxu0 0.0
    %107 = vmatprep.subr.mxu0 0.0
    %108 = vmatpush1.msra.mxu0 0.0
    %109 = vmatprep.subr.mxu0 0.0
    %110 = vmatpush1.msra.mxu0 0.0
    %111 = vmatprep.subr.mxu0 0.0
    %112 = vmatpush1.msra.mxu0 0.0
    %113 = vmatprep.subr.mxu0 0.0
    %114 = vmatpush1.msra.mxu0 0.0
    %115 = vmatprep.subr.mxu0 0.0
    %116 = vmatpush1.msra.mxu0 0.0
    %117 = vmatprep.subr.mxu0 0.0
    %118 = vmatpush1.msra.mxu0 0.0
    %119 = vmatprep.subr.mxu0 0.0
    %120 = vmatpush1.msra.mxu0 0.0
    %121 = vmatprep.subr.mxu0 0.0
    %122 = vmatpush1.msra.mxu0 0.0
    %123 = vmatprep.subr.mxu0 0.0
    %124 = vmatpush1.msra.mxu0 0.0
    %125 = vmatprep.subr.mxu0 0.0
    %126 = vmatpush1.msra.mxu0 0.0
    %127 = vmatprep.subr.mxu0 0.0
    %128 = vmatpush1.msra.mxu0 0.0
    %129 = vmatprep.subr.mxu0 0.0
    %130 = vmatpush1.msra.mxu0 0.0
    %131 = vmatprep.subr.mxu0 0.0
    %132 = vmatpush1.msra.mxu0 0.0
    %133 = vmatprep.subr.mxu0 0.0
    %134 = vmatpush1.msra.mxu0 0.0
    %135 = vmatprep.subr.mxu0 0.0
    %136 = vmatpush1.msra.mxu0 0.0
    %137 = vmatprep.subr.mxu0 0.0
    %138 = vmatpush1.msra.mxu0 0.0
    %139 = vmatprep.subr.mxu0 0.0
    %140 = vmatpush1.msra.mxu0 0.0
    %141 = vmatprep.mubr.f32.mxu0 0.0
    %142 = vmatmul.mubr.f32.gmra.mrb[0].mxu0 %v75
    %v143 = vpop.f32.mrb[0].mxu0
    %v144 = vadd.f32 %v71, %v143
    %v145 = vpop.f32.mrb[0].mxu0
    %146 = vdwg.mxu0
    %v147 = vtanh.pop %v144
    %v149 = vlaneseq
    %v150 = vshrl.u32 %v149, 7
    %v151 = vsub.s32 0, %v150
    %v152 = vrot.slane %v49, %v151
    %154 = vmatprep.subr.mxu0 0.0
    %155 = vmatpush1.msra.mxu0 %v33
    %156 = vmatprep.subr.mxu0 0.0
    %157 = vmatpush1.msra.mxu0 %v34
    %158 = vmatprep.subr.mxu0 0.0
    %159 = vmatpush1.msra.mxu0 %v35
    %160 = vmatprep.subr.mxu0 0.0
    %161 = vmatpush1.msra.mxu0 %v36
    %162 = vmatprep.subr.mxu0 0.0
    %163 = vmatpush1.msra.mxu0 %v37
    %164 = vmatprep.subr.mxu0 0.0
    %165 = vmatpush1.msra.mxu0 %v38
    %166 = vmatprep.subr.mxu0 0.0
    %167 = vmatpush1.msra.mxu0 %v39
    %168 = vmatprep.subr.mxu0 0.0
    %169 = vmatpush1.msra.mxu0 %v40
    %170 = vmatprep.subr.mxu0 0.0
    %171 = vmatpush1.msra.mxu0 %v41
    %172 = vmatprep.subr.mxu0 0.0
    %173 = vmatpush1.msra.mxu0 %v42
    %174 = vmatprep.subr.mxu0 0.0
    %175 = vmatpush1.msra.mxu0 %v43
    %176 = vmatprep.subr.mxu0 0.0
    %177 = vmatpush1.msra.mxu0 %v44
    %178 = vmatprep.subr.mxu0 0.0
    %179 = vmatpush1.msra.mxu0 %v45
    %180 = vmatprep.subr.mxu0 0.0
    %181 = vmatpush1.msra.mxu0 %v46
    %182 = vmatprep.subr.mxu0 0.0
    %183 = vmatpush1.msra.mxu0 %v47
    %184 = vmatprep.subr.mxu0 0.0
    %185 = vmatpush1.msra.mxu0 %v48
    %186 = vmatprep.subr.mxu0 0.0
    %187 = vmatpush1.msra.mxu0 0.0
    %188 = vmatprep.subr.mxu0 0.0
    %189 = vmatpush1.msra.mxu0 0.0
    %190 = vmatprep.subr.mxu0 0.0
    %191 = vmatpush1.msra.mxu0 0.0
    %192 = vmatprep.subr.mxu0 0.0
    %193 = vmatpush1.msra.mxu0 0.0
    %194 = vmatprep.subr.mxu0 0.0
    %195 = vmatpush1.msra.mxu0 0.0
    %196 = vmatprep.subr.mxu0 0.0
    %197 = vmatpush1.msra.mxu0 0.0
    %198 = vmatprep.subr.mxu0 0.0
    %199 = vmatpush1.msra.mxu0 0.0
    %200 = vmatprep.subr.mxu0 0.0
    %201 = vmatpush1.msra.mxu0 0.0
    %202 = vmatprep.subr.mxu0 0.0
    %203 = vmatpush1.msra.mxu0 0.0
    %204 = vmatprep.subr.mxu0 0.0
    %205 = vmatpush1.msra.mxu0 0.0
    %206 = vmatprep.subr.mxu0 0.0
    %207 = vmatpush1.msra.mxu0 0.0
    %208 = vmatprep.subr.mxu0 0.0
    %209 = vmatpush1.msra.mxu0 0.0
    %210 = vmatprep.subr.mxu0 0.0
    %211 = vmatpush1.msra.mxu0 0.0
    %212 = vmatprep.subr.mxu0 0.0
    %213 = vmatpush1.msra.mxu0 0.0
    %214 = vmatprep.subr.mxu0 0.0
    %215 = vmatpush1.msra.mxu0 0.0
    %216 = vmatprep.subr.mxu0 0.0
    %217 = vmatpush1.msra.mxu0 0.0
    %218 = vmatprep.mubr.f32.mxu0 0.0
    %219 = vmatmul.mubr.f32.gmra.mrb[0].mxu0 %v147
    %v220 = vpop.f32.mrb[0].mxu0
    %v221 = vadd.f32 %v152, %v220
    %v222 = vpop.f32.mrb[0].mxu0
    %223 = vdwg.mxu0
    %v224 = vtanh.pop %v221
    %v226 = vlaneseq
    %v227 = vshrl.u32 %v226, 7
    %v228 = vsub.s32 0, %v227
    %v229 = vrot.slane %v66, %v228
    %231 = vmatprep.subr.mxu0 0.0
    %232 = vmatpush1.msra.mxu0 %v50
    %233 = vmatprep.subr.mxu0 0.0
    %234 = vmatpush1.msra.mxu0 %v51
    %235 = vmatprep.subr.mxu0 0.0
    %236 = vmatpush1.msra.mxu0 %v52
    %237 = vmatprep.subr.mxu0 0.0
    %238 = vmatpush1.msra.mxu0 %v53
    %239 = vmatprep.subr.mxu0 0.0
    %240 = vmatpush1.msra.mxu0 %v54
    %241 = vmatprep.subr.mxu0 0.0
    %242 = vmatpush1.msra.mxu0 %v55
    %243 = vmatprep.subr.mxu0 0.0
    %244 = vmatpush1.msra.mxu0 %v56
    %245 = vmatprep.subr.mxu0 0.0
    %246 = vmatpush1.msra.mxu0 %v57
    %247 = vmatprep.subr.mxu0 0.0
    %248 = vmatpush1.msra.mxu0 %v58
    %249 = vmatprep.subr.mxu0 0.0
    %250 = vmatpush1.msra.mxu0 %v59
    %251 = vmatprep.subr.mxu0 0.0
    %252 = vmatpush1.msra.mxu0 %v60
    %253 = vmatprep.subr.mxu0 0.0
    %254 = vmatpush1.msra.mxu0 %v61
    %255 = vmatprep.subr.mxu0 0.0
    %256 = vmatpush1.msra.mxu0 %v62
    %257 = vmatprep.subr.mxu0 0.0
    %258 = vmatpush1.msra.mxu0 %v63
    %259 = vmatprep.subr.mxu0 0.0
    %260 = vmatpush1.msra.mxu0 %v64
    %261 = vmatprep.subr.mxu0 0.0
    %262 = vmatpush1.msra.mxu0 %v65
    %263 = vmatprep.subr.mxu0 0.0
    %264 = vmatpush1.msra.mxu0 0.0
    %265 = vmatprep.subr.mxu0 0.0
    %266 = vmatpush1.msra.mxu0 0.0
    %267 = vmatprep.subr.mxu0 0.0
    %268 = vmatpush1.msra.mxu0 0.0
    %269 = vmatprep.subr.mxu0 0.0
    %270 = vmatpush1.msra.mxu0 0.0
    %271 = vmatprep.subr.mxu0 0.0
    %272 = vmatpush1.msra.mxu0 0.0
    %273 = vmatprep.subr.mxu0 0.0
    %274 = vmatpush1.msra.mxu0 0.0
    %275 = vmatprep.subr.mxu0 0.0
    %276 = vmatpush1.msra.mxu0 0.0
    %277 = vmatprep.subr.mxu0 0.0
    %278 = vmatpush1.msra.mxu0 0.0
    %279 = vmatprep.subr.mxu0 0.0
    %280 = vmatpush1.msra.mxu0 0.0
    %281 = vmatprep.subr.mxu0 0.0
    %282 = vmatpush1.msra.mxu0 0.0
    %283 = vmatprep.subr.mxu0 0.0
    %284 = vmatpush1.msra.mxu0 0.0
    %285 = vmatprep.subr.mxu0 0.0
    %286 = vmatpush1.msra.mxu0 0.0
    %287 = vmatprep.subr.mxu0 0.0
    %288 = vmatpush1.msra.mxu0 0.0
    %289 = vmatprep.subr.mxu0 0.0
    %290 = vmatpush1.msra.mxu0 0.0
    %291 = vmatprep.subr.mxu0 0.0
    %292 = vmatpush1.msra.mxu0 0.0
    %293 = vmatprep.subr.mxu0 0.0
    %294 = vmatpush1.msra.mxu0 0.0
    %295 = vmatprep.mubr.f32.mxu0 0.0
    %296 = vmatmul.mubr.f32.gmra.mrb[0].mxu0 %v224
    %v297 = vpop.f32.mrb[0].mxu0
    %v298 = vadd.f32 %v229, %v297
    %v299 = vpop.f32.mrb[0].mxu0
    %300 = vdwg.mxu0
    %301 = vst.msk [vmem:[#allocation2] sm:$0xff] %vm73, %v298
    // Predicated region
    $region30: #{ode_func_forward.1} parent=1 // pred_check
      _
    $region31: #{ode_func_forward.1} parent=1 // pred_check_branch
      %303 = sbr.rel (0) target = $region33
    $region32: #{ode_func_forward.1} parent=1 // pred_region
      %s305 = ssub.s32 128, 128
      %306 = vsyncadd [#allocation3], %s305
      %s308 = sshll.u32 [#allocation2], 4
      %s309 = int_to_ptr.vmem [resolvable:$true] %s308
      %311 = dma.vmem_to_hbm [thread:$0]  %s309, 128, %s7, [#allocation3]
    $region33: #{ode_func_forward.1} parent=1 // pred_fallthru
      _
    // Predicated region
    $region34: #{ode_func_forward.1} parent=1 // pred_check
      _
    $region35: #{ode_func_forward.1} parent=1 // pred_check_branch
      %313 = sbr.rel (0) target = $region37
    $region36: #{ode_func_forward.1} parent=1 // pred_region
      %314 = dma.done [#allocation3], 128
    $region37: #{ode_func_forward.1} parent=1 // pred_fallthru
      _
    %315 = vsyncpa [#allocation3], 1

</llo_original>
